<compile_context>
chip_gen: v5e
topology: v5e:2x2
jax: 0.10.0
libtpu: 0.0.40
codegen_flags: <defaults>
</compile_context>

<pallas_src>
import math

import jax
import jax.numpy as jnp
from jax.experimental import pallas as pl
from jax.experimental.pallas import tpu as pltpu


def _attention_center_kernel(x_ref, nei_ref, w1t_ref, b1_ref, w2t_ref, b2_ref,
                             out_ref):
    x = x_ref[...]                                   # (tm, D)
    nei = nei_ref[...]                               # (tm, D)
    # Fold the torch.cat on the lane axis; single K=2D contraction on the MXU.
    cat = jnp.concatenate([x, nei], axis=-1)         # (tm, 2D)
    h = jnp.dot(cat, w1t_ref[...],
                preferred_element_type=jnp.float32) + b1_ref[...]
    h = jnp.maximum(h, 0.0)                          # ReLU (VPU)
    o = jnp.dot(h, w2t_ref[...],
                preferred_element_type=jnp.float32) + b2_ref[...]
    o = jnp.tanh(o)                                  # module's "sigmoid" is Tanh
    # Fused lane-dense output: [o*x | o*nei] stored as one (tm, 2D) slab.
    out_ref[...] = jnp.concatenate([o * x, o * nei], axis=-1).astype(out_ref.dtype)


def attention_center(x, nei, w1, b1, w2, b2, *, tm=None):
    """x, nei: [N, D] float32.  w1: [D, 2D], b1: [D], w2: [D, D], b2: [D]."""
    N, D = x.shape
    assert nei.shape == (N, D)
    assert w1.shape == (D, 2 * D) and w2.shape == (D, D)

    # Pre-transpose weights so the kernel does plain row-major matmuls.
    w1t = jnp.transpose(w1)          # [2D, D]
    w2t = jnp.transpose(w2)          # [D, D]
    b1r = b1.reshape(1, D)
    b2r = b2.reshape(1, D)

    # Big row tiles: per-block VMEM is tiny at D=32, so amortize the
    # per-grid-step overhead.  Pad N so tm is chosen for perf, not divisibility.
    if tm is None:
        tm = min(N, 512)
    n_blocks = pl.cdiv(N, tm)
    n_pad = n_blocks * tm
    if n_pad != N:
        pad = n_pad - N
        x_p = jnp.pad(x, ((0, pad), (0, 0)))
        nei_p = jnp.pad(nei, ((0, pad), (0, 0)))
    else:
        x_p, nei_p = x, nei

    grid = (n_blocks,)
    row_spec = pl.BlockSpec((tm, D), lambda i: (i, 0))
    out_spec = pl.BlockSpec((tm, 2 * D), lambda i: (i, 0))
    w1_spec = pl.BlockSpec((2 * D, D), lambda i: (0, 0))   # grid-invariant
    w2_spec = pl.BlockSpec((D, D), lambda i: (0, 0))       # grid-invariant
    b_spec = pl.BlockSpec((1, D), lambda i: (0, 0))        # grid-invariant

    fused = pl.pallas_call(
        _attention_center_kernel,
        out_shape=jax.ShapeDtypeStruct((n_pad, 2 * D), x.dtype),
        grid=grid,
        in_specs=[row_spec, row_spec, w1_spec, b_spec, w2_spec, b_spec],
        out_specs=out_spec,
        compiler_params=pltpu.CompilerParams(
            dimension_semantics=("parallel",)),
    )(x_p, nei_p, w1t, b1r, w2t, b2r)

    fused = fused[:N]
    return fused[:, :D], fused[:, D:]


def _init_linear(key, out_dim, in_dim):
    """Deterministic PyTorch-style Linear init: U(-1/sqrt(fan_in), 1/sqrt(fan_in))."""
    kw, kb = jax.random.split(key)
    bound = 1.0 / math.sqrt(in_dim)
    w = jax.random.uniform(kw, (out_dim, in_dim), jnp.float32, -bound, bound)
    b = jax.random.uniform(kb, (out_dim,), jnp.float32, -bound, bound)
    return w, b


def _reference(x, nei, w1, b1, w2, b2):
    cat = jnp.concatenate([x, nei], axis=1)
    h = jnp.maximum(cat @ w1.T + b1, 0.0)
    o = jnp.tanh(h @ w2.T + b2)
    return o * x, o * nei


if __name__ == "__main__":
    N, D = 128, 32  # small shapes: 128 rows, in_dimension = 32
    key = jax.random.PRNGKey(0)
    kx, kn, k1, k2 = jax.random.split(key, 4)

    x = jax.random.normal(kx, (N, D), jnp.float32)
    nei = jax.random.normal(kn, (N, D), jnp.float32)

    w1, b1 = _init_linear(k1, D, 2 * D)   # preconv1: Linear(2D -> D)
    w2, b2 = _init_linear(k2, D, D)       # preconv2: Linear(D -> D)

    out_x, out_nei = attention_center(x, nei, w1, b1, w2, b2)
    jax.block_until_ready((out_x, out_nei))

    ref_x, ref_nei = _reference(x, nei, w1, b1, w2, b2)
    assert jnp.allclose(out_x, ref_x, atol=1e-5, rtol=1e-5)
    assert jnp.allclose(out_nei, ref_nei, atol=1e-5, rtol=1e-5)

    print("KERNEL_OK")
</pallas_src>

<mosaic_0001>
module attributes {stable_mosaic.version = 11 : i64} {
  func.func @_attention_center_kernel(%arg0: i32, %arg1: memref<128x32xf32, #tpu.memory_space<vmem>>, %arg2: memref<128x32xf32, #tpu.memory_space<vmem>>, %arg3: memref<64x32xf32, #tpu.memory_space<vmem>>, %arg4: memref<1x32xf32, #tpu.memory_space<vmem>>, %arg5: memref<32x32xf32, #tpu.memory_space<vmem>>, %arg6: memref<1x32xf32, #tpu.memory_space<vmem>>, %arg7: memref<128x64xf32, #tpu.memory_space<vmem>>) attributes {dimension_semantics = [#tpu.dimension_semantics<parallel>], iteration_bounds = array<i64: 1>, scalar_prefetch = 0 : i64, scratch_operands = 0 : i64, tpu.core_type = #tpu.core_type<tc>, window_params = [{transform_indices = @transform_0, window_bounds = array<i64: 128, 32>}, {transform_indices = @transform_1, window_bounds = array<i64: 128, 32>}, {pipeline_mode = #tpu.pipeline_mode<synchronous>, transform_indices = @transform_2, window_bounds = array<i64: 64, 32>}, {pipeline_mode = #tpu.pipeline_mode<synchronous>, transform_indices = @transform_3, window_bounds = array<i64: 1, 32>}, {pipeline_mode = #tpu.pipeline_mode<synchronous>, transform_indices = @transform_4, window_bounds = array<i64: 32, 32>}, {pipeline_mode = #tpu.pipeline_mode<synchronous>, transform_indices = @transform_5, window_bounds = array<i64: 1, 32>}, {transform_indices = @transform_6, window_bounds = array<i64: 128, 64>}]} {
    %c0 = arith.constant 0 : index
    %c0_0 = arith.constant 0 : index
    %0 = vector.load %arg1[%c0, %c0_0] : memref<128x32xf32, #tpu.memory_space<vmem>>, vector<128x32xf32>
    %c0_1 = arith.constant 0 : index
    %c0_2 = arith.constant 0 : index
    %1 = vector.load %arg2[%c0_1, %c0_2] : memref<128x32xf32, #tpu.memory_space<vmem>>, vector<128x32xf32>
    %2 = tpu.concatenate %0, %1 in 1 : vector<128x32xf32>, vector<128x32xf32> -> vector<128x64xf32>
    %c0_3 = arith.constant 0 : index
    %c0_4 = arith.constant 0 : index
    %3 = vector.load %arg3[%c0_3, %c0_4] : memref<64x32xf32, #tpu.memory_space<vmem>>, vector<64x32xf32>
    %cst = arith.constant dense<0.000000e+00> : vector<128x32xf32>
    %4 = tpu.matmul %2, %3, %cst {dimension_numbers = #tpu.dot_dimension_numbers<[1], [0], [0], [1], [0, 0, 1, 1], [], []>} : vector<128x64xf32>, vector<64x32xf32>, vector<128x32xf32> -> vector<128x32xf32>
    %c0_5 = arith.constant 0 : index
    %c0_6 = arith.constant 0 : index
    %5 = vector.load %arg4[%c0_5, %c0_6] : memref<1x32xf32, #tpu.memory_space<vmem>>, vector<1x32xf32>
    %6 = vector.broadcast %5 : vector<1x32xf32> to vector<128x32xf32>
    %7 = arith.addf %4, %6 : vector<128x32xf32>
    %cst_7 = arith.constant 0.000000e+00 : f32
    %8 = vector.broadcast %cst_7 : f32 to vector<128x32xf32>
    %9 = arith.maximumf %7, %8 : vector<128x32xf32>
    %c0_8 = arith.constant 0 : index
    %c0_9 = arith.constant 0 : index
    %10 = vector.load %arg5[%c0_8, %c0_9] : memref<32x32xf32, #tpu.memory_space<vmem>>, vector<32x32xf32>
    %cst_10 = arith.constant dense<0.000000e+00> : vector<128x32xf32>
    %11 = tpu.matmul %9, %10, %cst_10 {dimension_numbers = #tpu.dot_dimension_numbers<[1], [0], [0], [1], [0, 0, 1, 1], [], []>} : vector<128x32xf32>, vector<32x32xf32>, vector<128x32xf32> -> vector<128x32xf32>
    %c0_11 = arith.constant 0 : index
    %c0_12 = arith.constant 0 : index
    %12 = vector.load %arg6[%c0_11, %c0_12] : memref<1x32xf32, #tpu.memory_space<vmem>>, vector<1x32xf32>
    %13 = vector.broadcast %12 : vector<1x32xf32> to vector<128x32xf32>
    %14 = arith.addf %11, %13 : vector<128x32xf32>
    %15 = math.tanh %14 : vector<128x32xf32>
    %16 = arith.mulf %15, %0 : vector<128x32xf32>
    %17 = arith.mulf %15, %1 : vector<128x32xf32>
    %18 = tpu.concatenate %16, %17 in 1 : vector<128x32xf32>, vector<128x32xf32> -> vector<128x64xf32>
    %c0_13 = arith.constant 0 : index
    %c0_14 = arith.constant 0 : index
    %19 = vector.load %arg7[%c0_13, %c0_14] : memref<128x64xf32, #tpu.memory_space<vmem>>, vector<128x64xf32>
    tpu.vector_store %arg7[%c0_13, %c0_14], %18 {strides = array<i32>} : memref<128x64xf32, #tpu.memory_space<vmem>>, vector<128x64xf32>,
    return
  }
  func.func @transform_0(%arg0: i32) -> (i32, i32) {
    %c0_i32 = arith.constant 0 : i32
    %c0_i32_0 = arith.constant 0 : i32
    return %arg0, %c0_i32 : i32, i32
  }
  func.func @transform_1(%arg0: i32) -> (i32, i32) {
    %c0_i32 = arith.constant 0 : i32
    %c0_i32_0 = arith.constant 0 : i32
    return %arg0, %c0_i32 : i32, i32
  }
  func.func @transform_2(%arg0: i32) -> (i32, i32) {
    %c0_i32 = arith.constant 0 : i32
    %c0_i32_0 = arith.constant 0 : i32
    %c0_i32_1 = arith.constant 0 : i32
    return %c0_i32, %c0_i32_0 : i32, i32
  }
  func.func @transform_3(%arg0: i32) -> (i32, i32) {
    %c0_i32 = arith.constant 0 : i32
    %c0_i32_0 = arith.constant 0 : i32
    %c0_i32_1 = arith.constant 0 : i32
    return %c0_i32, %c0_i32_0 : i32, i32
  }
  func.func @transform_4(%arg0: i32) -> (i32, i32) {
    %c0_i32 = arith.constant 0 : i32
    %c0_i32_0 = arith.constant 0 : i32
    %c0_i32_1 = arith.constant 0 : i32
    return %c0_i32, %c0_i32_0 : i32, i32
  }
  func.func @transform_5(%arg0: i32) -> (i32, i32) {
    %c0_i32 = arith.constant 0 : i32
    %c0_i32_0 = arith.constant 0 : i32
    %c0_i32_1 = arith.constant 0 : i32
    return %c0_i32, %c0_i32_0 : i32, i32
  }
  func.func @transform_6(%arg0: i32) -> (i32, i32) {
    %c0_i32 = arith.constant 0 : i32
    %c0_i32_0 = arith.constant 0 : i32
    return %arg0, %c0_i32 : i32, i32
  }
}

</mosaic_0001>

<llo_original>
// kernel: tpu_custom_call.1
$region0: #{tpu_custom_call.1}
  #allocation0 [shape = 'u32[]', space=smem, size = 0x4, offset = 0x4, fixed_abs, tag = 'smem constant byte address 0x4 - core index']
  #allocation1 [shape = 'u32[72,128]{1,0:T(1,128)}', space=vmem, size = 0x9000, scoped, tag = 'internal scratch']
  %s0 = inlined_call_operand.vmem [shape: f32[128,32], index: 0, kind: input, shape index: {}]
  %s1 = inlined_call_operand.vmem [shape: f32[128,32], index: 1, kind: input, shape index: {}]
  %s2 = inlined_call_operand.vmem [shape: f32[64,32], index: 2, kind: input, shape index: {}]
  %s3 = inlined_call_operand.vmem [shape: f32[1,32], index: 3, kind: input, shape index: {}]
  %s4 = inlined_call_operand.vmem [shape: f32[32,32], index: 4, kind: input, shape index: {}]
  %s5 = inlined_call_operand.vmem [shape: f32[1,32], index: 5, kind: input, shape index: {}]
  %s6 = inlined_call_operand.vmem [shape: f32[128,64], index: 6, kind: output, shape index: {}]
  %s7 = sld [smem:[#allocation0]]
  $region34: #{tpu_custom_call.1} parent=0
    _
  %s9 = ssub.s32 1, %s7
  %s10 = scalar_select 0, %s9, %s7
  // Predicated region
  $region2: #{tpu_custom_call.1} parent=0 // pred_check
    _
  $region3: #{tpu_custom_call.1} parent=0 // pred_check_branch
    %12 = sbr.rel (0) target = $region5
  $region4: #{tpu_custom_call.1} parent=0 // pred_region
    _
  $region5: #{tpu_custom_call.1} parent=0 // pred_fallthru
    _
  // Predicated region
  $region6: #{tpu_custom_call.1} parent=0 // pred_check
    _
  $region7: #{tpu_custom_call.1} parent=0 // pred_check_branch
    %14 = sbr.rel (0) target = $region9
  $region8: #{tpu_custom_call.1} parent=0 // pred_region
    _
  $region9: #{tpu_custom_call.1} parent=0 // pred_fallthru
    _
  // Predicated region
  $region10: #{tpu_custom_call.1} parent=0 // pred_check
    _
  $region11: #{tpu_custom_call.1} parent=0 // pred_check_branch
    %16 = sbr.rel (0) target = $region13
  $region12: #{tpu_custom_call.1} parent=0 // pred_region
    _
  $region13: #{tpu_custom_call.1} parent=0 // pred_fallthru
    _
  // Predicated region
  $region14: #{tpu_custom_call.1} parent=0 // pred_check
    _
  $region15: #{tpu_custom_call.1} parent=0 // pred_check_branch
    %18 = sbr.rel (0) target = $region17
  $region16: #{tpu_custom_call.1} parent=0 // pred_region
    _
  $region17: #{tpu_custom_call.1} parent=0 // pred_fallthru
    _
  // Predicated region
  $region18: #{tpu_custom_call.1} parent=0 // pred_check
    _
  $region19: #{tpu_custom_call.1} parent=0 // pred_check_branch
    %20 = sbr.rel (0) target = $region21
  $region20: #{tpu_custom_call.1} parent=0 // pred_region
    _
  $region21: #{tpu_custom_call.1} parent=0 // pred_fallthru
    _
  // Predicated region
  $region22: #{tpu_custom_call.1} parent=0 // pred_check
    _
  $region23: #{tpu_custom_call.1} parent=0 // pred_check_branch
    %22 = sbr.rel (0) target = $region25
  $region24: #{tpu_custom_call.1} parent=0 // pred_region
    _
  $region25: #{tpu_custom_call.1} parent=0 // pred_fallthru
    _
  %v23 = vld [vmem:[%s0] sm:$0xff]
  %v24 = vld [vmem:[%s0 + $0x8] sm:$0xff]
  %v25 = vld [vmem:[%s0 + $0x10] sm:$0xff]
  %v26 = vld [vmem:[%s0 + $0x18] sm:$0xff]
  %v27 = vld [vmem:[%s0 + $0x20] sm:$0xff]
  %v28 = vld [vmem:[%s0 + $0x28] sm:$0xff]
  %v29 = vld [vmem:[%s0 + $0x30] sm:$0xff]
  %v30 = vld [vmem:[%s0 + $0x38] sm:$0xff]
  %v31 = vld [vmem:[%s0 + $0x40] sm:$0xff]
  %v32 = vld [vmem:[%s0 + $0x48] sm:$0xff]
  %v33 = vld [vmem:[%s0 + $0x50] sm:$0xff]
  %v34 = vld [vmem:[%s0 + $0x58] sm:$0xff]
  %v35 = vld [vmem:[%s0 + $0x60] sm:$0xff]
  %v36 = vld [vmem:[%s0 + $0x68] sm:$0xff]
  %v37 = vld [vmem:[%s0 + $0x70] sm:$0xff]
  %v38 = vld [vmem:[%s0 + $0x78] sm:$0xff]
  %v39 = vld [vmem:[%s1] sm:$0xff]
  %v40 = vld [vmem:[%s1 + $0x8] sm:$0xff]
  %v41 = vld [vmem:[%s1 + $0x10] sm:$0xff]
  %v42 = vld [vmem:[%s1 + $0x18] sm:$0xff]
  %v43 = vld [vmem:[%s1 + $0x20] sm:$0xff]
  %v44 = vld [vmem:[%s1 + $0x28] sm:$0xff]
  %v45 = vld [vmem:[%s1 + $0x30] sm:$0xff]
  %v46 = vld [vmem:[%s1 + $0x38] sm:$0xff]
  %v47 = vld [vmem:[%s1 + $0x40] sm:$0xff]
  %v48 = vld [vmem:[%s1 + $0x48] sm:$0xff]
  %v49 = vld [vmem:[%s1 + $0x50] sm:$0xff]
  %v50 = vld [vmem:[%s1 + $0x58] sm:$0xff]
  %v51 = vld [vmem:[%s1 + $0x60] sm:$0xff]
  %v52 = vld [vmem:[%s1 + $0x68] sm:$0xff]
  %v53 = vld [vmem:[%s1 + $0x70] sm:$0xff]
  %v54 = vld [vmem:[%s1 + $0x78] sm:$0xff]
  %71 = vrot.lane.b32.xlu0 %v39, 32
  %v72 = vpop.permute.xlu0 %71
  %73 = vrot.lane.b32.xlu0 %v40, 32
  %v74 = vpop.permute.xlu0 %73
  %75 = vrot.lane.b32.xlu0 %v41, 32
  %v76 = vpop.permute.xlu0 %75
  %77 = vrot.lane.b32.xlu0 %v42, 32
  %v78 = vpop.permute.xlu0 %77
  %79 = vrot.lane.b32.xlu0 %v43, 32
  %v80 = vpop.permute.xlu0 %79
  %81 = vrot.lane.b32.xlu0 %v44, 32
  %v82 = vpop.permute.xlu0 %81
  %83 = vrot.lane.b32.xlu0 %v45, 32
  %v84 = vpop.permute.xlu0 %83
  %85 = vrot.lane.b32.xlu0 %v46, 32
  %v86 = vpop.permute.xlu0 %85
  %87 = vrot.lane.b32.xlu0 %v47, 32
  %v88 = vpop.permute.xlu0 %87
  %89 = vrot.lane.b32.xlu0 %v48, 32
  %v90 = vpop.permute.xlu0 %89
  %91 = vrot.lane.b32.xlu0 %v49, 32
  %v92 = vpop.permute.xlu0 %91
  %93 = vrot.lane.b32.xlu0 %v50, 32
  %v94 = vpop.permute.xlu0 %93
  %95 = vrot.lane.b32.xlu0 %v51, 32
  %v96 = vpop.permute.xlu0 %95
  %97 = vrot.lane.b32.xlu0 %v52, 32
  %v98 = vpop.permute.xlu0 %97
  %99 = vrot.lane.b32.xlu0 %v53, 32
  %v100 = vpop.permute.xlu0 %99
  %101 = vrot.lane.b32.xlu0 %v54, 32
  %v102 = vpop.permute.xlu0 %101
  %vm119 = vcmask 261120
  %v120 = vsel %vm119, %v23, %v72
  %v121 = vsel %vm119, %v24, %v74
  %v122 = vsel %vm119, %v25, %v76
  %v123 = vsel %vm119, %v26, %v78
  %v124 = vsel %vm119, %v27, %v80
  %v125 = vsel %vm119, %v28, %v82
  %v126 = vsel %vm119, %v29, %v84
  %v127 = vsel %vm119, %v30, %v86
  %v128 = vsel %vm119, %v31, %v88
  %v129 = vsel %vm119, %v32, %v90
  %v130 = vsel %vm119, %v33, %v92
  %v131 = vsel %vm119, %v34, %v94
  %v132 = vsel %vm119, %v35, %v96
  %v133 = vsel %vm119, %v36, %v98
  %v134 = vsel %vm119, %v37, %v100
  %v135 = vsel %vm119, %v38, %v102
  %v136 = vld [vmem:[%s2] sm:$0xff]
  %v137 = vld [vmem:[%s2 + $0x8] sm:$0xff]
  %v138 = vld [vmem:[%s2 + $0x10] sm:$0xff]
  %v139 = vld [vmem:[%s2 + $0x18] sm:$0xff]
  %v140 = vld [vmem:[%s2 + $0x20] sm:$0xff]
  %v141 = vld [vmem:[%s2 + $0x28] sm:$0xff]
  %v142 = vld [vmem:[%s2 + $0x30] sm:$0xff]
  %v143 = vld [vmem:[%s2 + $0x38] sm:$0xff]
  %v144 = vld [vmem:[%s3] sm:$0x1]
  %v146 = vperm.slane %v144, 0
  %vm148 = vcmask 523264
  %v150 = vsel %vm148, %v120, 0
  %v153 = vsel %vm148, %v121, 0
  %v156 = vsel %vm148, %v122, 0
  %v159 = vsel %vm148, %v123, 0
  %v162 = vsel %vm148, %v124, 0
  %v165 = vsel %vm148, %v125, 0
  %v168 = vsel %vm148, %v126, 0
  %v171 = vsel %vm148, %v127, 0
  %v174 = vsel %vm148, %v128, 0
  %v177 = vsel %vm148, %v129, 0
  %v180 = vsel %vm148, %v130, 0
  %v183 = vsel %vm148, %v131, 0
  %v186 = vsel %vm148, %v132, 0
  %v189 = vsel %vm148, %v133, 0
  %v192 = vsel %vm148, %v134, 0
  %v195 = vsel %vm148, %v135, 0
  %197 = vmatpush.msra.mxu0 0.0
  %198 = vmatpush.msra.mxu0 0.0
  %199 = vmatpush.msra.mxu0 0.0
  %200 = vmatpush.msra.mxu0 0.0
  %201 = vmatpush.msra.mxu0 0.0
  %202 = vmatpush.msra.mxu0 0.0
  %203 = vmatpush.msra.mxu0 0.0
  %204 = vmatpush.msra.mxu0 0.0
  %205 = vmatpush.msra.mxu0 %v143
  %206 = vmatpush.msra.mxu0 %v142
  %207 = vmatpush.msra.mxu0 %v141
  %208 = vmatpush.msra.mxu0 %v140
  %209 = vmatpush.msra.mxu0 %v139
  %210 = vmatpush.msra.mxu0 %v138
  %211 = vmatpush.msra.mxu0 %v137
  %212 = vmatpush.msra.mxu0 %v136
  %213 = vmatmul.f32.gmra.mxu0 %v150
  %v214 = vpop.f32.mrf.mxu0
  %v215 = vadd.f32 %v146, %v214
  %216 = vmatmul.f32.gmra.mxu0 %v153
  %v217 = vpop.f32.mrf.mxu0
  %v218 = vadd.f32 %v146, %v217
  %219 = vmatmul.f32.gmra.mxu0 %v156
  %v220 = vpop.f32.mrf.mxu0
  %v221 = vadd.f32 %v146, %v220
  %222 = vmatmul.f32.gmra.mxu0 %v159
  %v223 = vpop.f32.mrf.mxu0
  %v224 = vadd.f32 %v146, %v223
  %225 = vmatmul.f32.gmra.mxu0 %v162
  %v226 = vpop.f32.mrf.mxu0
  %v227 = vadd.f32 %v146, %v226
  %228 = vmatmul.f32.gmra.mxu0 %v165
  %v229 = vpop.f32.mrf.mxu0
  %v230 = vadd.f32 %v146, %v229
  %231 = vmatmul.f32.gmra.mxu0 %v168
  %v232 = vpop.f32.mrf.mxu0
  %v233 = vadd.f32 %v146, %v232
  %234 = vmatmul.f32.gmra.mxu0 %v171
  %v235 = vpop.f32.mrf.mxu0
  %v236 = vadd.f32 %v146, %v235
  %237 = vmatmul.f32.gmra.mxu0 %v174
  %v238 = vpop.f32.mrf.mxu0
  %v239 = vadd.f32 %v146, %v238
  %240 = vmatmul.f32.gmra.mxu0 %v177
  %v241 = vpop.f32.mrf.mxu0
  %v242 = vadd.f32 %v146, %v241
  %243 = vmatmul.f32.gmra.mxu0 %v180
  %v244 = vpop.f32.mrf.mxu0
  %v245 = vadd.f32 %v146, %v244
  %246 = vmatmul.f32.gmra.mxu0 %v183
  %v247 = vpop.f32.mrf.mxu0
  %v248 = vadd.f32 %v146, %v247
  %249 = vmatmul.f32.gmra.mxu0 %v186
  %v250 = vpop.f32.mrf.mxu0
  %v251 = vadd.f32 %v146, %v250
  %252 = vmatmul.f32.gmra.mxu0 %v189
  %v253 = vpop.f32.mrf.mxu0
  %v254 = vadd.f32 %v146, %v253
  %255 = vmatmul.f32.gmra.mxu0 %v192
  %v256 = vpop.f32.mrf.mxu0
  %v257 = vadd.f32 %v146, %v256
  %258 = vmatmul.f32.gmra.mxu0 %v195
  %v259 = vpop.f32.mrf.mxu0
  %v260 = vadd.f32 %v146, %v259
  %261 = vdwg.mxu0
  %v262 = vmax.f32 %v215, 0.0
  %v263 = vmax.f32 %v218, 0.0
  %v264 = vmax.f32 %v221, 0.0
  %v265 = vmax.f32 %v224, 0.0
  %v266 = vmax.f32 %v227, 0.0
  %v267 = vmax.f32 %v230, 0.0
  %v268 = vmax.f32 %v233, 0.0
  %v269 = vmax.f32 %v236, 0.0
  %v270 = vmax.f32 %v239, 0.0
  %v271 = vmax.f32 %v242, 0.0
  %v272 = vmax.f32 %v245, 0.0
  %v273 = vmax.f32 %v248, 0.0
  %v274 = vmax.f32 %v251, 0.0
  %v275 = vmax.f32 %v254, 0.0
  %v276 = vmax.f32 %v257, 0.0
  %v277 = vmax.f32 %v260, 0.0
  %v278 = vld [vmem:[%s4] sm:$0xff]
  %v279 = vld [vmem:[%s4 + $0x8] sm:$0xff]
  %v280 = vld [vmem:[%s4 + $0x10] sm:$0xff]
  %v281 = vld [vmem:[%s4 + $0x18] sm:$0xff]
  %v282 = vld [vmem:[%s5] sm:$0x1]
  %v284 = vperm.slane %v282, 0
  %v287 = vsel %vm119, %v262, 0
  %v290 = vsel %vm119, %v263, 0
  %v293 = vsel %vm119, %v264, 0
  %v296 = vsel %vm119, %v265, 0
  %v299 = vsel %vm119, %v266, 0
  %v302 = vsel %vm119, %v267, 0
  %v305 = vsel %vm119, %v268, 0
  %v308 = vsel %vm119, %v269, 0
  %v311 = vsel %vm119, %v270, 0
  %v314 = vsel %vm119, %v271, 0
  %v317 = vsel %vm119, %v272, 0
  %v320 = vsel %vm119, %v273, 0
  %v323 = vsel %vm119, %v274, 0
  %v326 = vsel %vm119, %v275, 0
  %v329 = vsel %vm119, %v276, 0
  %v332 = vsel %vm119, %v277, 0
  %334 = vmatpush.msra.mxu0 0.0
  %335 = vmatpush.msra.mxu0 0.0
  %336 = vmatpush.msra.mxu0 0.0
  %337 = vmatpush.msra.mxu0 0.0
  %338 = vmatpush.msra.mxu0 0.0
  %339 = vmatpush.msra.mxu0 0.0
  %340 = vmatpush.msra.mxu0 0.0
  %341 = vmatpush.msra.mxu0 0.0
  %342 = vmatpush.msra.mxu0 0.0
  %343 = vmatpush.msra.mxu0 0.0
  %344 = vmatpush.msra.mxu0 0.0
  %345 = vmatpush.msra.mxu0 0.0
  %346 = vmatpush.msra.mxu0 %v281
  %347 = vmatpush.msra.mxu0 %v280
  %348 = vmatpush.msra.mxu0 %v279
  %349 = vmatpush.msra.mxu0 %v278
  %350 = vmatmul.f32.gmra.mxu0 %v287
  %v351 = vpop.f32.mrf.mxu0
  %v352 = vadd.f32 %v284, %v351
  %353 = vmatmul.f32.gmra.mxu0 %v290
  %v354 = vpop.f32.mrf.mxu0
  %v355 = vadd.f32 %v284, %v354
  %356 = vmatmul.f32.gmra.mxu0 %v293
  %v357 = vpop.f32.mrf.mxu0
  %v358 = vadd.f32 %v284, %v357
  %359 = vmatmul.f32.gmra.mxu0 %v296
  %v360 = vpop.f32.mrf.mxu0
  %v361 = vadd.f32 %v284, %v360
  %362 = vmatmul.f32.gmra.mxu0 %v299
  %v363 = vpop.f32.mrf.mxu0
  %v364 = vadd.f32 %v284, %v363
  %365 = vmatmul.f32.gmra.mxu0 %v302
  %v366 = vpop.f32.mrf.mxu0
  %v367 = vadd.f32 %v284, %v366
  %368 = vmatmul.f32.gmra.mxu0 %v305
  %v369 = vpop.f32.mrf.mxu0
  %v370 = vadd.f32 %v284, %v369
  %371 = vmatmul.f32.gmra.mxu0 %v308
  %v372 = vpop.f32.mrf.mxu0
  %v373 = vadd.f32 %v284, %v372
  %374 = vmatmul.f32.gmra.mxu0 %v311
  %v375 = vpop.f32.mrf.mxu0
  %v376 = vadd.f32 %v284, %v375
  %377 = vmatmul.f32.gmra.mxu0 %v314
  %v378 = vpop.f32.mrf.mxu0
  %v379 = vadd.f32 %v284, %v378
  %380 = vmatmul.f32.gmra.mxu0 %v317
  %v381 = vpop.f32.mrf.mxu0
  %v382 = vadd.f32 %v284, %v381
  %383 = vmatmul.f32.gmra.mxu0 %v320
  %v384 = vpop.f32.mrf.mxu0
  %v385 = vadd.f32 %v284, %v384
  %386 = vmatmul.f32.gmra.mxu0 %v323
  %v387 = vpop.f32.mrf.mxu0
  %v388 = vadd.f32 %v284, %v387
  %389 = vmatmul.f32.gmra.mxu0 %v326
  %v390 = vpop.f32.mrf.mxu0
  %v391 = vadd.f32 %v284, %v390
  %392 = vmatmul.f32.gmra.mxu0 %v329
  %v393 = vpop.f32.mrf.mxu0
  %v394 = vadd.f32 %v284, %v393
  %395 = vmatmul.f32.gmra.mxu0 %v332
  %v396 = vpop.f32.mrf.mxu0
  %v397 = vadd.f32 %v284, %v396
  %398 = vdwg.mxu0
  %v399 = vtanh.pop %v352
  %v400 = vtanh.pop %v355
  %v401 = vtanh.pop %v358
  %v402 = vtanh.pop %v361
  %v403 = vtanh.pop %v364
  %v404 = vtanh.pop %v367
  %v405 = vtanh.pop %v370
  %v406 = vtanh.pop %v373
  %v407 = vtanh.pop %v376
  %v408 = vtanh.pop %v379
  %v409 = vtanh.pop %v382
  %v410 = vtanh.pop %v385
  %v411 = vtanh.pop %v388
  %v412 = vtanh.pop %v391
  %v413 = vtanh.pop %v394
  %v414 = vtanh.pop %v397
  %v415 = vmul.f32 %v399, %v23
  %v416 = vmul.f32 %v400, %v24
  %v417 = vmul.f32 %v401, %v25
  %v418 = vmul.f32 %v402, %v26
  %v419 = vmul.f32 %v403, %v27
  %v420 = vmul.f32 %v404, %v28
  %v421 = vmul.f32 %v405, %v29
  %v422 = vmul.f32 %v406, %v30
  %v423 = vmul.f32 %v407, %v31
  %v424 = vmul.f32 %v408, %v32
  %v425 = vmul.f32 %v409, %v33
  %v426 = vmul.f32 %v410, %v34
  %v427 = vmul.f32 %v411, %v35
  %v428 = vmul.f32 %v412, %v36
  %v429 = vmul.f32 %v413, %v37
  %v430 = vmul.f32 %v414, %v38
  %v431 = vmul.f32 %v399, %v39
  %v432 = vmul.f32 %v400, %v40
  %v433 = vmul.f32 %v401, %v41
  %v434 = vmul.f32 %v402, %v42
  %v435 = vmul.f32 %v403, %v43
  %v436 = vmul.f32 %v404, %v44
  %v437 = vmul.f32 %v405, %v45
  %v438 = vmul.f32 %v406, %v46
  %v439 = vmul.f32 %v407, %v47
  %v440 = vmul.f32 %v408, %v48
  %v441 = vmul.f32 %v409, %v49
  %v442 = vmul.f32 %v410, %v50
  %v443 = vmul.f32 %v411, %v51
  %v444 = vmul.f32 %v412, %v52
  %v445 = vmul.f32 %v413, %v53
  %v446 = vmul.f32 %v414, %v54
  %463 = vrot.lane.b32.xlu0 %v431, 32
  %v464 = vpop.permute.xlu0 %463
  %465 = vrot.lane.b32.xlu0 %v432, 32
  %v466 = vpop.permute.xlu0 %465
  %467 = vrot.lane.b32.xlu0 %v433, 32
  %v468 = vpop.permute.xlu0 %467
  %469 = vrot.lane.b32.xlu0 %v434, 32
  %v470 = vpop.permute.xlu0 %469
  %471 = vrot.lane.b32.xlu0 %v435, 32
  %v472 = vpop.permute.xlu0 %471
  %473 = vrot.lane.b32.xlu0 %v436, 32
  %v474 = vpop.permute.xlu0 %473
  %475 = vrot.lane.b32.xlu0 %v437, 32
  %v476 = vpop.permute.xlu0 %475
  %477 = vrot.lane.b32.xlu0 %v438, 32
  %v478 = vpop.permute.xlu0 %477
  %479 = vrot.lane.b32.xlu0 %v439, 32
  %v480 = vpop.permute.xlu0 %479
  %481 = vrot.lane.b32.xlu0 %v440, 32
  %v482 = vpop.permute.xlu0 %481
  %483 = vrot.lane.b32.xlu0 %v441, 32
  %v484 = vpop.permute.xlu0 %483
  %485 = vrot.lane.b32.xlu0 %v442, 32
  %v486 = vpop.permute.xlu0 %485
  %487 = vrot.lane.b32.xlu0 %v443, 32
  %v488 = vpop.permute.xlu0 %487
  %489 = vrot.lane.b32.xlu0 %v444, 32
  %v490 = vpop.permute.xlu0 %489
  %491 = vrot.lane.b32.xlu0 %v445, 32
  %v492 = vpop.permute.xlu0 %491
  %493 = vrot.lane.b32.xlu0 %v446, 32
  %v494 = vpop.permute.xlu0 %493
  %v511 = vsel %vm119, %v415, %v464
  %v512 = vsel %vm119, %v416, %v466
  %v513 = vsel %vm119, %v417, %v468
  %v514 = vsel %vm119, %v418, %v470
  %v515 = vsel %vm119, %v419, %v472
  %v516 = vsel %vm119, %v420, %v474
  %v517 = vsel %vm119, %v421, %v476
  %v518 = vsel %vm119, %v422, %v478
  %v519 = vsel %vm119, %v423, %v480
  %v520 = vsel %vm119, %v424, %v482
  %v521 = vsel %vm119, %v425, %v484
  %v522 = vsel %vm119, %v426, %v486
  %v523 = vsel %vm119, %v427, %v488
  %v524 = vsel %vm119, %v428, %v490
  %v525 = vsel %vm119, %v429, %v492
  %v526 = vsel %vm119, %v430, %v494
  %527 = vst.msk [vmem:[%s6] sm:$0xff] %vm148, %v511
  %528 = vst.msk [vmem:[%s6 + $0x8] sm:$0xff] %vm148, %v512
  %529 = vst.msk [vmem:[%s6 + $0x10] sm:$0xff] %vm148, %v513
  %530 = vst.msk [vmem:[%s6 + $0x18] sm:$0xff] %vm148, %v514
  %531 = vst.msk [vmem:[%s6 + $0x20] sm:$0xff] %vm148, %v515
  %532 = vst.msk [vmem:[%s6 + $0x28] sm:$0xff] %vm148, %v516
  %533 = vst.msk [vmem:[%s6 + $0x30] sm:$0xff] %vm148, %v517
  %534 = vst.msk [vmem:[%s6 + $0x38] sm:$0xff] %vm148, %v518
  %535 = vst.msk [vmem:[%s6 + $0x40] sm:$0xff] %vm148, %v519
  %536 = vst.msk [vmem:[%s6 + $0x48] sm:$0xff] %vm148, %v520
  %537 = vst.msk [vmem:[%s6 + $0x50] sm:$0xff] %vm148, %v521
  %538 = vst.msk [vmem:[%s6 + $0x58] sm:$0xff] %vm148, %v522
  %539 = vst.msk [vmem:[%s6 + $0x60] sm:$0xff] %vm148, %v523
  %540 = vst.msk [vmem:[%s6 + $0x68] sm:$0xff] %vm148, %v524
  %541 = vst.msk [vmem:[%s6 + $0x70] sm:$0xff] %vm148, %v525
  %542 = vst.msk [vmem:[%s6 + $0x78] sm:$0xff] %vm148, %v526
  // Predicated region
  $region26: #{tpu_custom_call.1} parent=0 // pred_check
    _
  $region27: #{tpu_custom_call.1} parent=0 // pred_check_branch
    %544 = sbr.rel (0) target = $region29
  $region28: #{tpu_custom_call.1} parent=0 // pred_region
    _
  $region29: #{tpu_custom_call.1} parent=0 // pred_fallthru
    _
  // Predicated region
  $region30: #{tpu_custom_call.1} parent=0 // pred_check
    _
  $region31: #{tpu_custom_call.1} parent=0 // pred_check_branch
    %546 = sbr.rel (0) target = $region33
  $region32: #{tpu_custom_call.1} parent=0 // pred_region
    _
  $region33: #{tpu_custom_call.1} parent=0 // pred_fallthru
    _

</llo_original>
